<compile_context>
chip_gen: v7x
topology: tpu7x:2x2x1
jax: 0.10.0
libtpu: 0.0.40
codegen_flags: <defaults>
</compile_context>

<pallas_src>
import functools

import jax
import jax.numpy as jnp
from jax.experimental import pallas as pl
from jax.experimental.pallas import tpu as pltpu


def _cdiv(a, b):
    return -(-a // b)


@functools.lru_cache(maxsize=None)
def _tpu_params():
    """(physical VMEM bytes, TensorCores sharing the grid) with safe fallbacks."""
    vmem_bytes = 64 * 1024 * 1024          # conservative default (v7x-sized)
    try:
        info = pltpu.get_tpu_info()
        cap = getattr(info, "vmem_capacity_bytes", None)
        if cap:
            vmem_bytes = int(cap)
    except Exception:
        pass
    n_cores = 1
    try:
        kind = jax.devices()[0].device_kind.lower()
        if "lite" in kind or "v5e" in kind or "v6" in kind:
            n_cores = 1                    # v5e / v6e: single TensorCore
        elif "v4" in kind or "v5" in kind or "7" in kind:
            n_cores = 2                    # megacore (v4/v5p) or v7x: 2 TCs
    except Exception:
        pass
    return vmem_bytes, n_cores


def _pick_tile(n_rows, vocab, itemsize, block_budget_bytes):
    """Rows per block from a per-generation VMEM budget, capped at 2048 rows."""
    per_row = vocab * itemsize
    tile = max(1, block_budget_bytes // per_row)
    tile = min(tile, 2048)
    if tile >= n_rows:
        # One block covering every row; a full-extent block dim is always legal.
        return n_rows
    mult = {4: 8, 2: 16, 1: 32}.get(itemsize, 8)   # sublane packing per dtype
    tile = max(mult, (tile // mult) * mult)
    return tile
    # TODO(synk): for very large vocabularies (rows-per-tile < ~64) add a vocab
    # grid axis with online (flash-style) logsumexp so the row tile stays large.


def _lmloss_kernel(tgt_ref, logits_ref, out_ref, acc_ref,
                   *, n_rows, tile, total_blocks, guard_tail):
    o = pl.program_id(0)               # parallel (per-TensorCore) axis
    i = pl.program_id(1)               # arbitrary (reduction) axis
    n_inner = pl.num_programs(1)
    blk = o * n_inner + i

    @pl.when(i == 0)
    def _():
        acc_ref[...] = jnp.zeros_like(acc_ref)

    def _compute():
        tgt = tgt_ref[...]                                 # (tile, 1) int32
        x = logits_ref[...]                                # (tile, V) native dtype

        # Pass 1 (native dtype; max and one-hot select+sum are exact): per-row
        # max and the target logit, without any full-width f32 copy.
        x_max = jnp.max(x, axis=-1, keepdims=True)         # (tile, 1)
        vocab_iota = jax.lax.broadcasted_iota(jnp.int32, x.shape, 1)
        zero = jnp.asarray(0, dtype=x.dtype)
        gathered = jnp.sum(jnp.where(vocab_iota == tgt, x, zero),
                           axis=-1, keepdims=True)         # (tile, 1)

        # Pass 2: logsumexp with the f32 upcast fused into the shift/exp/sum
        # expression (single full-width pass, f32 accumulation).
        # TODO(synk): bf16 exp with f32 lane-sum would ~2x EUP throughput on
        # v6e/v7x if the tolerance budget allows it (keep f32 on v5e).
        sum_exp = jnp.sum(
            jnp.exp(x.astype(jnp.float32) - x_max.astype(jnp.float32)),
            axis=-1, keepdims=True)                        # (tile, 1) f32

        picked = (gathered.astype(jnp.float32)
                  - x_max.astype(jnp.float32)
                  - jnp.log(sum_exp))                      # (tile, 1) f32

        # Row validity: global row index < N (ragged last block) AND target != 0
        # (padding).  Strict select keeps garbage rows from contaminating sums.
        rows = blk * tile + jax.lax.broadcasted_iota(jnp.int32, (tile, 1), 0)
        valid = jnp.logical_and(rows < n_rows, tgt != 0)

        s = jnp.sum(jnp.where(valid, picked, 0.0))         # scalar f32
        c = jnp.sum(valid.astype(jnp.float32))             # scalar f32

        # Accumulate the two scalars into a tiny lane-dense (1, 8, 128) scratch:
        # lane 0 -> masked log-prob sum, lane 1 -> non-pad token count.
        lane = jax.lax.broadcasted_iota(jnp.int32, acc_ref.shape, 2)
        acc_ref[...] += jnp.where(lane == 0, s, jnp.where(lane == 1, c, 0.0))

    if guard_tail:
        # Redundant clamped tail steps only touch the accumulator, no full-tile
        # exp/gather pass.
        pl.when(blk < total_blocks)(_compute)
    else:
        _compute()

    @pl.when(i == n_inner - 1)
    def _():
        out_ref[...] = acc_ref[...]


@functools.partial(jax.jit, static_argnames=("reduce", "tile"))
def lm_loss(target, output, reduce=False, tile=None):
    """target: (B, S) int, output: (B, S, V) float -> scalar float32 loss."""
    B, S, V = output.shape
    N = B * S

    tgt_flat = target.reshape(N, 1).astype(jnp.int32)
    logits_flat = output.reshape(N, V)                 # keep native dtype (e.g. bf16)

    vmem_bytes, n_cores = _tpu_params()
    itemsize = jnp.dtype(logits_flat.dtype).itemsize

    if tile is None:
        # Native-dtype block budget; leaves room for the double buffer and the
        # f32 temporaries of the fused exp pass within the scoped VMEM limit.
        block_budget = max(1 << 20, vmem_bytes // 12)
        tile = _pick_tile(N, V, itemsize, block_budget)
    tile = int(tile)

    total_blocks = _cdiv(N, tile)
    n_outer = max(1, min(n_cores, total_blocks))       # 2 chunks only if 2 TCs
    n_inner = _cdiv(total_blocks, n_outer)
    guard_tail = (n_outer * n_inner != total_blocks)

    def row_block(o, i):
        # Clamp so redundant tail grid points re-read the last real block
        # (consecutive equal indices skip the DMA; compute is skipped in-kernel).
        return (jnp.minimum(o * n_inner + i, total_blocks - 1), 0)

    kernel = functools.partial(_lmloss_kernel, n_rows=N, tile=tile,
                               total_blocks=total_blocks, guard_tail=guard_tail)

    vmem_limit = int(min(vmem_bytes * 3 // 4, 96 * 1024 * 1024))

    parts = pl.pallas_call(
        kernel,
        out_shape=jax.ShapeDtypeStruct((n_outer, 8, 128), jnp.float32),
        grid=(n_outer, n_inner),
        in_specs=[
            pl.BlockSpec((tile, 1), row_block),
            pl.BlockSpec((tile, V), row_block),
        ],
        out_specs=pl.BlockSpec((1, 8, 128), lambda o, i: (o, 0, 0)),
        scratch_shapes=[
            pltpu.VMEM((1, 8, 128), jnp.float32),      # per-chunk sum/count acc
        ],
        compiler_params=pltpu.CompilerParams(
            dimension_semantics=("parallel", "arbitrary"),
            vmem_limit_bytes=vmem_limit,
        ),
    )(tgt_flat, logits_flat)

    total_sum = jnp.sum(parts[:, 0, 0])
    total_cnt = jnp.sum(parts[:, 0, 1])
    # NOTE: if every target is padding this is 0/0 -> NaN, matching the reference.
    loss = -(total_sum / total_cnt)
    if reduce:
        loss = loss / B
    return loss


def _reference(target, output, reduce=False):
    logp = jax.nn.log_softmax(output.astype(jnp.float32), axis=-1)
    picked = jnp.take_along_axis(
        logp, target[..., None].astype(jnp.int32), axis=-1)[..., 0]
    mask = (target != 0).astype(jnp.float32)
    loss = jnp.sum(picked * mask) / jnp.sum(mask)
    if reduce:
        loss = loss / output.shape[0]
    return -loss


if __name__ == "__main__":
    key = jax.random.PRNGKey(0)
    k1, k2, k3, k4 = jax.random.split(key, 4)

    # --- Test 1: small shapes, auto tile (single block), f32 logits -------------
    B, S, V = 2, 8, 512
    target = jax.random.randint(k1, (B, S), 0, V, dtype=jnp.int32)
    target = target.at[:, -2:].set(0)            # some padding tokens
    output = jax.random.normal(k2, (B, S, V), dtype=jnp.float32)

    loss = lm_loss(target, output, reduce=False)
    jax.block_until_ready(loss)
    ref = _reference(target, output, reduce=False)
    assert jnp.allclose(loss, ref, rtol=1e-5, atol=1e-5), (loss, ref)

    loss_r = lm_loss(target, output, reduce=True)
    jax.block_until_ready(loss_r)
    ref_r = _reference(target, output, reduce=True)
    assert jnp.allclose(loss_r, ref_r, rtol=1e-5, atol=1e-5), (loss_r, ref_r)

    # --- Test 2: native bf16 logits (upcast fused inside the kernel) ------------
    output_bf16 = output.astype(jnp.bfloat16)
    loss_bf = lm_loss(target, output_bf16, reduce=False)
    jax.block_until_ready(loss_bf)
    ref_bf = _reference(target, output_bf16, reduce=False)
    assert jnp.allclose(loss_bf, ref_bf, rtol=1e-4, atol=1e-4), (loss_bf, ref_bf)

    # --- Test 3: rows not a multiple of the tile -> multi-block grid, boundary
    #             masking, tail-guard and the parallel/arbitrary split exercised -
    B2, S2, V2 = 4, 10, 256
    target2 = jax.random.randint(k3, (B2, S2), 0, V2, dtype=jnp.int32)
    target2 = target2.at[:, -1].set(0)
    output2 = jax.random.normal(k4, (B2, S2, V2), dtype=jnp.float32)
    loss2 = lm_loss(target2, output2, reduce=False, tile=16)
    jax.block_until_ready(loss2)
    ref2 = _reference(target2, output2, reduce=False)
    assert jnp.allclose(loss2, ref2, rtol=1e-5, atol=1e-5), (loss2, ref2)

    print("KERNEL_OK")
</pallas_src>

<mosaic_0001>
module attributes {stable_mosaic.version = 11 : i64} {
  func.func @_lmloss_kernel(%arg0: i32, %arg1: i32, %arg2: memref<16x1xi32, #tpu.memory_space<vmem>>, %arg3: memref<16x512xf32, #tpu.memory_space<vmem>>, %arg4: memref<1x8x128xf32, #tpu.memory_space<vmem>>, %arg5: memref<1x8x128xf32, #tpu.memory_space<vmem>>) attributes {dimension_semantics = [#tpu.dimension_semantics<parallel>, #tpu.dimension_semantics<arbitrary>], iteration_bounds = array<i64: 1, 1>, scalar_prefetch = 0 : i64, scratch_operands = 1 : i64, tpu.core_type = #tpu.core_type<tc>, window_params = [{transform_indices = @transform_0, window_bounds = array<i64: 16, 1>}, {transform_indices = @transform_1, window_bounds = array<i64: 16, 512>}, {transform_indices = @transform_2, window_bounds = array<i64: 1, 8, 128>}]} {
    %c1_i32 = arith.constant 1 : i32
    %0 = arith.muli %arg0, %c1_i32 : i32
    %1 = arith.addi %0, %arg1 : i32
    %c0_i32 = arith.constant 0 : i32
    %2 = arith.cmpi eq, %arg1, %c0_i32 : i32
    %3 = arith.extui %2 : i1 to i32
    %c0_i32_0 = arith.constant 0 : i32
    %4 = arith.cmpi ne, %3, %c0_i32_0 : i32
    scf.if %4 {
      %cst_23 = arith.constant 0.000000e+00 : f32
      %61 = vector.broadcast %cst_23 : f32 to vector<1x8x128xf32>
      %c0_24 = arith.constant 0 : index
      %c0_25 = arith.constant 0 : index
      %c0_26 = arith.constant 0 : index
      %62 = vector.load %arg5[%c0_24, %c0_25, %c0_26] : memref<1x8x128xf32, #tpu.memory_space<vmem>>, vector<1x8x128xf32>
      tpu.vector_store %arg5[%c0_24, %c0_25, %c0_26], %61 {strides = array<i32>} : memref<1x8x128xf32, #tpu.memory_space<vmem>>, vector<1x8x128xf32>,
    } else {
    }
    %c0 = arith.constant 0 : index
    %c0_1 = arith.constant 0 : index
    %5 = vector.load %arg2[%c0, %c0_1] : memref<16x1xi32, #tpu.memory_space<vmem>>, vector<16x1xi32>
    %c0_2 = arith.constant 0 : index
    %c0_3 = arith.constant 0 : index
    %6 = vector.load %arg3[%c0_2, %c0_3] : memref<16x512xf32, #tpu.memory_space<vmem>>, vector<16x512xf32>
    %cst = arith.constant dense<0xFF800000> : vector<16xf32>
    %7 = vector.multi_reduction <maximumf>, %6, %cst [1] : vector<16x512xf32> to vector<16xf32>
    %8 = vector.shape_cast %7 : vector<16xf32> to vector<16x1xf32>
    %9 = tpu.iota {dimensions = array<i32: 1>} : vector<16x512xi32>
    %10 = vector.broadcast %5 : vector<16x1xi32> to vector<16x512xi32>
    %11 = arith.cmpi eq, %9, %10 : vector<16x512xi32>
    %cst_4 = arith.constant 0.000000e+00 : f32
    %12 = vector.broadcast %cst_4 : f32 to vector<16x512xf32>
    %13 = arith.select %11, %6, %12 : vector<16x512xi1>, vector<16x512xf32>
    %cst_5 = arith.constant dense<0.000000e+00> : vector<16xf32>
    %14 = vector.multi_reduction <add>, %13, %cst_5 [1] : vector<16x512xf32> to vector<16xf32>
    %15 = vector.shape_cast %14 : vector<16xf32> to vector<16x1xf32>
    %16 = vector.broadcast %8 : vector<16x1xf32> to vector<16x512xf32>
    %17 = arith.subf %6, %16 : vector<16x512xf32>
    %18 = math.exp %17 : vector<16x512xf32>
    %cst_6 = arith.constant dense<0.000000e+00> : vector<16xf32>
    %19 = vector.multi_reduction <add>, %18, %cst_6 [1] : vector<16x512xf32> to vector<16xf32>
    %20 = vector.shape_cast %19 : vector<16xf32> to vector<16x1xf32>
    %21 = arith.subf %15, %8 : vector<16x1xf32>
    %22 = math.log %20 : vector<16x1xf32>
    %23 = arith.subf %21, %22 : vector<16x1xf32>
    %c16_i32 = arith.constant 16 : i32
    %24 = arith.muli %1, %c16_i32 : i32
    %25 = tpu.iota {dimensions = array<i32: 0>} : vector<16x1xi32>
    %26 = vector.broadcast %24 : i32 to vector<16x1xi32>
    %27 = arith.addi %26, %25 : vector<16x1xi32>
    %c16_i32_7 = arith.constant 16 : i32
    %28 = vector.broadcast %c16_i32_7 : i32 to vector<16x1xi32>
    %29 = arith.cmpi slt, %27, %28 : vector<16x1xi32>
    %c0_i32_8 = arith.constant 0 : i32
    %30 = vector.broadcast %c0_i32_8 : i32 to vector<16x1xi32>
    %31 = arith.cmpi ne, %5, %30 : vector<16x1xi32>
    %32 = arith.andi %29, %31 : vector<16x1xi1>
    %cst_9 = arith.constant 0.000000e+00 : f32
    %33 = vector.broadcast %cst_9 : f32 to vector<16x1xf32>
    %34 = arith.select %32, %23, %33 : vector<16x1xi1>, vector<16x1xf32>
    %35 = vector.shape_cast %34 : vector<16x1xf32> to vector<1x16x1xf32>
    %cst_10 = arith.constant dense<0.000000e+00> : vector<1xf32>
    %36 = vector.multi_reduction <add>, %35, %cst_10 [1, 2] : vector<1x16x1xf32> to vector<1xf32>
    %37 = vector.shape_cast %36 : vector<1xf32> to vector<1x1x1xf32>
    %38 = vector.extract %37[0, 0, 0] : f32 from vector<1x1x1xf32>
    %39 = arith.extui %32 : vector<16x1xi1> to vector<16x1xi32>
    %40 = arith.sitofp %39 : vector<16x1xi32> to vector<16x1xf32>
    %41 = vector.shape_cast %40 : vector<16x1xf32> to vector<1x16x1xf32>
    %cst_11 = arith.constant dense<0.000000e+00> : vector<1xf32>
    %42 = vector.multi_reduction <add>, %41, %cst_11 [1, 2] : vector<1x16x1xf32> to vector<1xf32>
    %43 = vector.shape_cast %42 : vector<1xf32> to vector<1x1x1xf32>
    %44 = vector.extract %43[0, 0, 0] : f32 from vector<1x1x1xf32>
    %45 = tpu.iota {dimensions = array<i32: 2>} : vector<1x8x128xi32>
    %c0_12 = arith.constant 0 : index
    %c0_13 = arith.constant 0 : index
    %c0_14 = arith.constant 0 : index
    %46 = vector.load %arg5[%c0_12, %c0_13, %c0_14] : memref<1x8x128xf32, #tpu.memory_space<vmem>>, vector<1x8x128xf32>
    %c0_i32_15 = arith.constant 0 : i32
    %47 = vector.broadcast %c0_i32_15 : i32 to vector<1x8x128xi32>
    %48 = arith.cmpi eq, %45, %47 : vector<1x8x128xi32>
    %c1_i32_16 = arith.constant 1 : i32
    %49 = vector.broadcast %c1_i32_16 : i32 to vector<1x8x128xi32>
    %50 = arith.cmpi eq, %45, %49 : vector<1x8x128xi32>
    %cst_17 = arith.constant 0.000000e+00 : f32
    %51 = vector.broadcast %44 : f32 to vector<1x8x128xf32>
    %52 = vector.broadcast %cst_17 : f32 to vector<1x8x128xf32>
    %53 = arith.select %50, %51, %52 : vector<1x8x128xi1>, vector<1x8x128xf32>
    %54 = vector.broadcast %38 : f32 to vector<1x8x128xf32>
    %55 = arith.select %48, %54, %53 : vector<1x8x128xi1>, vector<1x8x128xf32>
    %56 = arith.addf %46, %55 : vector<1x8x128xf32>
    %c0_18 = arith.constant 0 : index
    %c0_19 = arith.constant 0 : index
    %c0_20 = arith.constant 0 : index
    %57 = vector.load %arg5[%c0_18, %c0_19, %c0_20] : memref<1x8x128xf32, #tpu.memory_space<vmem>>, vector<1x8x128xf32>
    tpu.vector_store %arg5[%c0_18, %c0_19, %c0_20], %56 {strides = array<i32>} : memref<1x8x128xf32, #tpu.memory_space<vmem>>, vector<1x8x128xf32>,
    %c0_i32_21 = arith.constant 0 : i32
    %58 = arith.cmpi eq, %arg1, %c0_i32_21 : i32
    %59 = arith.extui %58 : i1 to i32
    %c0_i32_22 = arith.constant 0 : i32
    %60 = arith.cmpi ne, %59, %c0_i32_22 : i32
    scf.if %60 {
      %c0_23 = arith.constant 0 : index
      %c0_24 = arith.constant 0 : index
      %c0_25 = arith.constant 0 : index
      %61 = vector.load %arg5[%c0_23, %c0_24, %c0_25] : memref<1x8x128xf32, #tpu.memory_space<vmem>>, vector<1x8x128xf32>
      %c0_26 = arith.constant 0 : index
      %c0_27 = arith.constant 0 : index
      %c0_28 = arith.constant 0 : index
      %62 = vector.load %arg4[%c0_26, %c0_27, %c0_28] : memref<1x8x128xf32, #tpu.memory_space<vmem>>, vector<1x8x128xf32>
      tpu.vector_store %arg4[%c0_26, %c0_27, %c0_28], %61 {strides = array<i32>} : memref<1x8x128xf32, #tpu.memory_space<vmem>>, vector<1x8x128xf32>,
    } else {
    }
    return
  }
  func.func @transform_0(%arg0: i32, %arg1: i32) -> (i32, i32) {
    %c1_i32 = arith.constant 1 : i32
    %0 = arith.muli %arg0, %c1_i32 : i32
    %1 = arith.addi %0, %arg1 : i32
    %c0_i32 = arith.constant 0 : i32
    %2 = arith.minsi %1, %c0_i32 : i32
    %c0_i32_0 = arith.constant 0 : i32
    %c0_i32_1 = arith.constant 0 : i32
    return %2, %c0_i32_0 : i32, i32
  }
  func.func @transform_1(%arg0: i32, %arg1: i32) -> (i32, i32) {
    %c1_i32 = arith.constant 1 : i32
    %0 = arith.muli %arg0, %c1_i32 : i32
    %1 = arith.addi %0, %arg1 : i32
    %c0_i32 = arith.constant 0 : i32
    %2 = arith.minsi %1, %c0_i32 : i32
    %c0_i32_0 = arith.constant 0 : i32
    %c0_i32_1 = arith.constant 0 : i32
    return %2, %c0_i32_0 : i32, i32
  }
  func.func @transform_2(%arg0: i32, %arg1: i32) -> (i32, i32, i32) {
    %c0_i32 = arith.constant 0 : i32
    %c0_i32_0 = arith.constant 0 : i32
    %c0_i32_1 = arith.constant 0 : i32
    return %arg0, %c0_i32, %c0_i32_0 : i32, i32, i32
  }
}

</mosaic_0001>

<llo_original>
// kernel: lm_loss.1
$region0: #{lm_loss.1}
  #allocation0 [shape = 'u32[]', space=smem, size = 0x4, offset = 0x4, fixed_abs, tag = 'smem constant byte address 0x4 - core index']
  #allocation1 [shape = 'u32[144,128]{1,0:T(1,128)}', space=vmem, size = 0x12000, scoped, tag = 'internal scratch']
  #allocation2 [shape = 'f32[1,8,128]{2,1,0:T(8,128)}', space=vmem, size = 0x1000, scoped, tag = 'scratch operand']
  %s0 = inlined_call_operand.vmem [shape: s32[16,1], index: 0, kind: input, shape index: {}]
  %s1 = inlined_call_operand.hbm [shape: f32[16,512], index: 1, kind: input, shape index: {}]
  %s2 = inlined_call_operand.vmem [shape: f32[1,8,128], index: 2, kind: output, shape index: {}]
  %s3 = sld [smem:[#allocation0]]
  $region30: #{lm_loss.1} parent=0
    _
  %s5 = ssub.s32 1, %s3
  %s6 = scalar_select 0, %s5, %s3
  $region1: #{lm_loss.1} parent=0
    #allocation3 [shape = 'u8[32768]{0}', space=vmem, size = 0x8000, scoped, tag = 'input window, operand 1, single buffered']
    #allocation4 [shape = 's32[1]{0}', space=sflag, size = 0x4, scoped, tag = 'scoped memory for lm_loss.1']
    %7 = vsyncpa [#allocation4], 0
    // Predicated region
    $region2: #{lm_loss.1} parent=1 // pred_check
      _
    $region3: #{lm_loss.1} parent=1 // pred_check_branch
      %9 = sbr.rel (0) target = $region5
    $region4: #{lm_loss.1} parent=1 // pred_region
      %s10 = sadd.s32 0, 0
      %p11 = scmp.lt.s32.totalorder %s10, 0
      %s12 = scalar_select %p11, %s10, 0
      %s13 = smul.u32 2, %s12
      %p14 = scmp.lt.s32.totalorder %s13, 1
      %s15 = scalar_select %p14, %s13, 1
      %s16 = smul.addr %s15, 8
      %s17 = scalar_lea.vmem %s0, %s16
      %s18 = sadd.s32 0, 0
      %p19 = scmp.lt.s32.totalorder %s18, 0
      %s20 = scalar_select %p19, %s18, 0
      %s21 = smul.u32 2, %s20
    $region5: #{lm_loss.1} parent=1 // pred_fallthru
      _
    // Predicated region
    $region6: #{lm_loss.1} parent=1 // pred_check
      _
    $region7: #{lm_loss.1} parent=1 // pred_check_branch
      %23 = sbr.rel (0) target = $region9
    $region8: #{lm_loss.1} parent=1 // pred_region
      %s24 = sadd.s32 0, 0
      %p25 = scmp.lt.s32.totalorder %s24, 0
      %s26 = scalar_select %p25, %s24, 0
      %s27 = smul.u32 2, %s26
      %s29 = ssub.s32 1024, 1024
      %30 = vsyncadd [#allocation4], %s29
      %s31 = smul.addr %s27, 4
      %s32 = smul.addr %s31, 128
      %s33 = scalar_lea.hbm %s1, %s32
      %s34 = sshll.u32 [#allocation3], 4
      %s35 = int_to_ptr.vmem [resolvable:$true] %s34
      %40 = dma.hbm_to_vmem [thread:$0]  %s33, 1024, %s35, [#allocation4], 512, 512, 32
    $region9: #{lm_loss.1} parent=1 // pred_fallthru
      _
    // Predicated region
    $region10: #{lm_loss.1} parent=1 // pred_check
      _
    $region11: #{lm_loss.1} parent=1 // pred_check_branch
      %42 = sbr.rel (0) target = $region13
    $region12: #{lm_loss.1} parent=1 // pred_region
      %43 = dma.done [#allocation4], 1024
    $region13: #{lm_loss.1} parent=1 // pred_fallthru
      _
    %s44 = sadd.s32 0, 0
    %p45 = scmp.lt.s32.totalorder %s44, 0
    %s46 = scalar_select %p45, %s44, 0
    %s47 = smul.u32 2, %s46
    %p48 = scmp.lt.s32.totalorder %s47, 1
    %s49 = scalar_select %p48, %s47, 1
    %s50 = smul.addr %s49, 8
    %s51 = scalar_lea.vmem %s0, %s50
    %s52 = sadd.s32 0, 0
    %p53 = scmp.lt.s32.totalorder %s52, 0
    %s54 = scalar_select %p53, %s52, 0
    %s55 = smul.u32 2, %s54
    %p56 = scmp.lt.s32.totalorder %s55, 1
    %s57 = scalar_select %p56, %s55, 1
    %s58 = smul.addr %s57, 8
    %s59 = scalar_lea.vmem %s0, %s58
    %s60 = sadd.s32 0, 0
    %p61 = scmp.lt.s32.totalorder %s60, 0
    %s62 = scalar_select %p61, %s60, 0
    %s63 = smul.u32 2, %s62
    %s64 = sadd.s32 0, 0
    %p65 = scmp.lt.s32.totalorder %s64, 0
    %s66 = scalar_select %p65, %s64, 0
    %s67 = smul.u32 2, %s66
    %s68 = sadd.s32 0, 0
    %p69 = scmp.eq.s32.totalorder 0, 0
    // Predicated region
    $region14: #{lm_loss.1} parent=1 // pred_check
      %p70 = pneg %p69
    $region15: #{lm_loss.1} parent=1 // pred_check_branch
      %72 = sbr.rel (%p70) target = $region17
    $region16: #{lm_loss.1} parent=1 // pred_region
      %73 = vst [vmem:[#allocation2] sm:$0xff] 0.0
    $region17: #{lm_loss.1} parent=1 // pred_fallthru
      _
    %v74 = vld [vmem:[%s59] sm:$0xff]
    %v75 = vld [vmem:[%s59 + $0x8] sm:$0xff]
    %v76 = vld [vmem:[#allocation3] sm:$0xff]
    %v77 = vld [vmem:[#allocation3 + $0x8] sm:$0xff]
    %v78 = vld [vmem:[#allocation3 + $0x10] sm:$0xff]
    %v79 = vld [vmem:[#allocation3 + $0x18] sm:$0xff]
    %v80 = vld [vmem:[#allocation3 + $0x20] sm:$0xff]
    %v81 = vld [vmem:[#allocation3 + $0x28] sm:$0xff]
    %v82 = vld [vmem:[#allocation3 + $0x30] sm:$0xff]
    %v83 = vld [vmem:[#allocation3 + $0x38] sm:$0xff]
    %v84 = vmax.f32 %v76, %v78
    %v85 = vmax.f32 %v77, %v79
    %v86 = vmax.f32 %v84, %v85
    %87 = vmax.xlane.f32.xlu0 %v86
    %v88 = vpop.xlane.xlu0 %87
    %v89 = vmax.f32 %v80, %v82
    %v90 = vmax.f32 %v81, %v83
    %v91 = vmax.f32 %v89, %v90
    %92 = vmax.xlane.f32.xlu0 %v91
    %v93 = vpop.xlane.xlu0 %92
    %v94 = vlaneseq
    %v95 = vand.u32 %v94, 127
    %v96 = vadd.s32 %v95, 128
    %v97 = vadd.s32 %v95, 256
    %v98 = vadd.s32 %v95, 384
    %99 = vset.pattern.permute.xlu0 0
    %100 = vperm.xlu0 %99, %v74
    %v101 = vpop.permute.xlu0 %100
    %102 = vset.pattern.permute.xlu0 0
    %103 = vperm.xlu0 %102, %v75
    %v104 = vpop.permute.xlu0 %103
    %vm105 = vcmp.eq.s32.totalorder %v95, %v101
    %vm106 = vcmp.eq.s32.totalorder %v96, %v101
    %vm107 = vcmp.eq.s32.totalorder %v97, %v101
    %vm108 = vcmp.eq.s32.totalorder %v98, %v101
    %vm109 = vcmp.eq.s32.totalorder %v95, %v104
    %vm110 = vcmp.eq.s32.totalorder %v96, %v104
    %vm111 = vcmp.eq.s32.totalorder %v97, %v104
    %vm112 = vcmp.eq.s32.totalorder %v98, %v104
    %v113 = vsel %vm105, %v76, 0.0
    %v114 = vsel %vm106, %v77, 0.0
    %v115 = vsel %vm107, %v78, 0.0
    %v116 = vsel %vm108, %v79, 0.0
    %v117 = vsel %vm109, %v80, 0.0
    %v118 = vsel %vm110, %v81, 0.0
    %v119 = vsel %vm111, %v82, 0.0
    %v120 = vsel %vm112, %v83, 0.0
    %v121 = vadd.f32 %v113, %v114
    %v122 = vadd.f32 %v121, %v115
    %v123 = vadd.f32 %v122, %v116
    %124 = vadd.xlane.f32.xlu0 %v123
    %v125 = vpop.xlane.xlu0 %124
    %v126 = vadd.f32 %v117, %v118
    %v127 = vadd.f32 %v126, %v119
    %v128 = vadd.f32 %v127, %v120
    %129 = vadd.xlane.f32.xlu0 %v128
    %v130 = vpop.xlane.xlu0 %129
    %v131 = vsub.f32 %v76, %v88
    %v132 = vsub.f32 %v77, %v88
    %v133 = vsub.f32 %v78, %v88
    %v134 = vsub.f32 %v79, %v88
    %v135 = vsub.f32 %v80, %v93
    %v136 = vsub.f32 %v81, %v93
    %v137 = vsub.f32 %v82, %v93
    %v138 = vsub.f32 %v83, %v93
    %v139 = vmul.f32 %v131, 1.442695
    %v140 = vpow.pop %v139
    %v141 = vmul.f32 %v132, 1.442695
    %v142 = vpow.pop %v141
    %v143 = vmul.f32 %v133, 1.442695
    %v144 = vpow.pop %v143
    %v145 = vmul.f32 %v134, 1.442695
    %v146 = vpow.pop %v145
    %v147 = vmul.f32 %v135, 1.442695
    %v148 = vpow.pop %v147
    %v149 = vmul.f32 %v136, 1.442695
    %v150 = vpow.pop %v149
    %v151 = vmul.f32 %v137, 1.442695
    %v152 = vpow.pop %v151
    %v153 = vmul.f32 %v138, 1.442695
    %v154 = vpow.pop %v153
    %v155 = vadd.f32 %v140, %v142
    %v156 = vadd.f32 %v155, %v144
    %v157 = vadd.f32 %v156, %v146
    %158 = vadd.xlane.f32.xlu0 %v157
    %v159 = vpop.xlane.xlu0 %158
    %v160 = vadd.f32 %v148, %v150
    %v161 = vadd.f32 %v160, %v152
    %v162 = vadd.f32 %v161, %v154
    %163 = vadd.xlane.f32.xlu0 %v162
    %v164 = vpop.xlane.xlu0 %163
    %v165 = vsub.f32 %v125, %v88
    %v166 = vsub.f32 %v130, %v93
    %v167 = vlog2.pop %v159
    %v168 = vmul.f32 %v167, 0.6931472
    %v169 = vlog2.pop %v164
    %v170 = vmul.f32 %v169, 0.6931472
    %v171 = vsub.f32 %v165, %v168
    %v172 = vsub.f32 %v166, %v170
    %s173 = smul.u32 %s68, 16
    %v174 = vlaneseq
    %v175 = vshrl.u32 %v174, 7
    %v176 = vadd.s32 %v175, 8
    %v177 = vstv %s173
    %v178 = vadd.s32 %v177, %v175
    %v179 = vadd.s32 %v177, %v176
    %vm180 = vcmp.lt.s32.totalorder %v178, 16
    %vm181 = vcmp.lt.s32.totalorder %v179, 16
    %vm182 = vcmp.ne.s32.totalorder %v74, 0
    %vm183 = vcmp.ne.s32.totalorder %v75, 0
    %vm184 = vmand %vm180, %vm182
    %vm185 = vmand %vm181, %vm183
    %v186 = vsel %vm184, %v171, 0.0
    %v187 = vsel %vm185, %v172, 0.0
    %vm188 = vcmask 7168
    %v189 = vsel %vm188, %v186, 0.0
    %v190 = vsel %vm188, %v187, 0.0
    %v191 = vadd.f32 %v189, %v190
    %192 = vadd.xlane.f32.xlu0 %v191
    %v193 = vpop.xlane.xlu0 %192
    %v194 = vrot.slane %v193, 4
    %v195 = vadd.f32 %v193, %v194
    %v196 = vrot.slane %v195, 2
    %v197 = vadd.f32 %v195, %v196
    %v198 = vrot.slane %v197, 1
    %v199 = vadd.f32 %v197, %v198
    %s200 = vtos %v199
    %v201 = vsel %vm184, 1, 0
    %v202 = vsel %vm185, 1, 0
    %v203 = vcvt.s32.f32 %v201
    %v204 = vcvt.s32.f32 %v202
    %v205 = vsel %vm188, %v203, 0.0
    %v206 = vsel %vm188, %v204, 0.0
    %v207 = vadd.f32 %v205, %v206
    %208 = vadd.xlane.f32.xlu0 %v207
    %v209 = vpop.xlane.xlu0 %208
    %v210 = vrot.slane %v209, 4
    %v211 = vadd.f32 %v209, %v210
    %v212 = vrot.slane %v211, 2
    %v213 = vadd.f32 %v211, %v212
    %v214 = vrot.slane %v213, 1
    %v215 = vadd.f32 %v213, %v214
    %s216 = vtos %v215
    %v217 = vld [vmem:[#allocation2] sm:$0xff]
    %vm218 = vcmp.eq.s32.totalorder %v95, 0
    %vm219 = vcmp.eq.s32.totalorder %v95, 1
    %v220 = vstv %s216
    %v221 = vsel %vm219, %v220, 0.0
    %v222 = vstv %s200
    %v223 = vsel %vm218, %v222, %v221
    %v224 = vadd.f32 %v217, %v223
    %225 = vst [vmem:[#allocation2] sm:$0xff] %v224
    // Predicated region
    $region18: #{lm_loss.1} parent=1 // pred_check
      %p226 = pneg %p69
    $region19: #{lm_loss.1} parent=1 // pred_check_branch
      %228 = sbr.rel (%p226) target = $region21
    $region20: #{lm_loss.1} parent=1 // pred_region
      %v229 = vld [vmem:[#allocation2] sm:$0xff]
      %230 = vst [vmem:[%s2] sm:$0xff] %v229
    $region21: #{lm_loss.1} parent=1 // pred_fallthru
      _
    // Predicated region
    $region22: #{lm_loss.1} parent=1 // pred_check
      _
    $region23: #{lm_loss.1} parent=1 // pred_check_branch
      %232 = sbr.rel (0) target = $region25
    $region24: #{lm_loss.1} parent=1 // pred_region
      _
    $region25: #{lm_loss.1} parent=1 // pred_fallthru
      _
    // Predicated region
    $region26: #{lm_loss.1} parent=1 // pred_check
      _
    $region27: #{lm_loss.1} parent=1 // pred_check_branch
      %234 = sbr.rel (0) target = $region29
    $region28: #{lm_loss.1} parent=1 // pred_region
      _
    $region29: #{lm_loss.1} parent=1 // pred_fallthru
      _
    %235 = vsyncpa [#allocation4], 1

</llo_original>
